<compile_context>
chip_gen: v7x
topology: tpu7x:2x2x1
jax: 0.10.0
libtpu: 0.0.40
codegen_flags: <defaults>
</compile_context>

<pallas_src>
import jax
import jax.numpy as jnp
from jax.experimental import pallas as pl
from jax.experimental.pallas import tpu as pltpu

NUM_CLASSES = 10
IN_DIM = 784
H1 = 128
PAD_N = 128  # lane width used to pad the 64-wide and 10-wide tails


def mlp_kernel(x_ref, w1_ref, b1_ref, w2_ref, b2_ref, w3_ref, b3_ref, out_ref):
    # x_ref: (TB, 784) bf16; w1: (784, 128) bf16; b1: (1, 128) f32
    # w2: (128, 128) bf16 (zero-padded from (128, 64)); b2: (1, 128) f32
    # w3: (128, 128) bf16 (zero-padded from (64, 10));  b3: (1, 128) f32
    x = x_ref[...]  # bf16 -> MXU (f32 accumulation)

    # fc1 + relu
    h1 = jnp.dot(x, w1_ref[...], preferred_element_type=jnp.float32) + b1_ref[...]
    h1 = jnp.maximum(h1, 0.0)

    # fc2 + relu (lane-padded: cols 64..127 are exactly zero after relu)
    h2 = jnp.dot(h1.astype(jnp.bfloat16), w2_ref[...],
                 preferred_element_type=jnp.float32) + b2_ref[...]
    h2 = jnp.maximum(h2, 0.0)

    # fc3 (lane-padded output; padded rows of w3 are zero so they contribute nothing)
    logits = jnp.dot(h2.astype(jnp.bfloat16), w3_ref[...],
                     preferred_element_type=jnp.float32) + b3_ref[...]

    # Mask padded class columns so log_softmax normalizes over the real 10 classes.
    col = jax.lax.broadcasted_iota(jnp.int32, logits.shape, 1)
    logits = jnp.where(col < NUM_CLASSES, logits, -jnp.inf)

    # Numerically stable log_softmax along dim=1 (all f32).
    m = jnp.max(logits, axis=-1, keepdims=True)
    shifted = logits - m
    lse = jnp.log(jnp.sum(jnp.exp(shifted), axis=-1, keepdims=True))
    out_ref[...] = (shifted - lse).astype(out_ref.dtype)


def _round_up(n, m):
    return ((n + m - 1) // m) * m


@jax.jit
def net_forward(x, params):
    """x: (B, 1, 28, 28) (or anything with 784 trailing elements per row)."""
    w1, b1, w2, b2, w3, b3 = params
    x2d = x.reshape(-1, IN_DIM)
    B = x2d.shape[0]

    # bf16 feed for the dominant HBM stream (x) and all MXU weight operands.
    x2d = x2d.astype(jnp.bfloat16)
    w1 = w1.astype(jnp.bfloat16)
    b1 = b1.astype(jnp.float32)

    # Lane-pad the narrow tails with zeros (cheap, one-time XLA pads of tiny arrays).
    w2p = jnp.pad(w2.astype(jnp.bfloat16), ((0, 0), (0, PAD_N - w2.shape[1])))
    b2p = jnp.pad(b2.astype(jnp.float32), ((0, 0), (0, PAD_N - b2.shape[1])))
    w3p = jnp.pad(w3.astype(jnp.bfloat16),
                  ((0, PAD_N - w3.shape[0]), (0, PAD_N - w3.shape[1])))
    b3p = jnp.pad(b3.astype(jnp.float32), ((0, 0), (0, PAD_N - b3.shape[1])))

    # Batch tile: 1024 rows (~1.5 MiB bf16 x-tile; fits every generation's
    # default scoped VMEM with double buffering). Small batches use one tile.
    if B >= 1024:
        TB = 1024
    else:
        TB = max(16, _round_up(B, 16))  # multiple of 16 for bf16 sublane packing
    B_pad = pl.cdiv(B, TB) * TB
    if B_pad != B:
        x2d = jnp.pad(x2d, ((0, B_pad - B), (0, 0)))

    grid = (B_pad // TB,)

    def resident(shape):
        # Constant block index -> stays VMEM-resident across grid steps.
        return pl.BlockSpec(shape, lambda i: (0, 0))

    flops = 2 * B_pad * (IN_DIM * H1 + H1 * PAD_N + PAD_N * PAD_N)
    bytes_accessed = (B_pad * IN_DIM * 2                       # x (bf16)
                      + B_pad * PAD_N * 4                      # out (f32, padded)
                      + (IN_DIM * H1 + H1 * PAD_N + PAD_N * PAD_N) * 2  # weights (bf16)
                      + 3 * PAD_N * 4)                         # biases (f32)
    cost = pl.CostEstimate(flops=flops,
                           transcendentals=B_pad * PAD_N,
                           bytes_accessed=bytes_accessed)

    out = pl.pallas_call(
        mlp_kernel,
        out_shape=jax.ShapeDtypeStruct((B_pad, PAD_N), jnp.float32),
        grid=grid,
        in_specs=[
            pl.BlockSpec((TB, IN_DIM), lambda i: (i, 0)),  # streamed activations
            resident((IN_DIM, H1)),
            resident((1, H1)),
            resident((H1, PAD_N)),
            resident((1, PAD_N)),
            resident((PAD_N, PAD_N)),
            resident((1, PAD_N)),
        ],
        out_specs=pl.BlockSpec((TB, PAD_N), lambda i: (i, 0)),
        compiler_params=pltpu.CompilerParams(
            dimension_semantics=("parallel",)),
        cost_estimate=cost,
    )(x2d, w1, b1, w2p, b2p, w3p, b3p)

    return out[:B, :NUM_CLASSES]


def init_params(key):
    """Deterministic init matching nn.Linear shapes (weights stored transposed
    as (in, out) so the kernel computes x @ W directly)."""
    k1, k2, k3, k4, k5, k6 = jax.random.split(key, 6)

    def linear(kw, kb, fan_in, fan_out):
        bound = 1.0 / jnp.sqrt(fan_in)
        w = jax.random.uniform(kw, (fan_in, fan_out), jnp.float32, -bound, bound)
        b = jax.random.uniform(kb, (1, fan_out), jnp.float32, -bound, bound)
        return w, b

    w1, b1 = linear(k1, k2, 784, 128)
    w2, b2 = linear(k3, k4, 128, 64)
    w3, b3 = linear(k5, k6, 64, 10)
    return (w1, b1, w2, b2, w3, b3)


def _reference_forward(x, params):
    """Pure-JAX f32 reference with identical semantics (for correctness check)."""
    w1, b1, w2, b2, w3, b3 = params
    x2d = x.reshape(-1, IN_DIM).astype(jnp.float32)
    h1 = jnp.maximum(x2d @ w1 + b1, 0.0)
    h2 = jnp.maximum(h1 @ w2 + b2, 0.0)
    logits = h2 @ w3 + b3
    return jax.nn.log_softmax(logits, axis=-1)


if __name__ == "__main__":
    key = jax.random.PRNGKey(0)
    key_x, key_p = jax.random.split(key)

    params = init_params(key_p)
    # small MNIST-like batch: (8, 1, 28, 28) NCHW
    x = jax.random.normal(key_x, (8, 1, 28, 28), dtype=jnp.float32)

    out = net_forward(x, params)
    out = jax.block_until_ready(out)

    assert out.shape == (8, NUM_CLASSES)

    # log_softmax rows must sum to 1 in prob space (exact normalization in f32)
    row_sums = jnp.sum(jnp.exp(out), axis=-1)
    assert jnp.allclose(row_sums, jnp.ones_like(row_sums), atol=1e-4)

    # match the f32 reference (loose tolerance for the bf16 MXU feeds)
    ref = _reference_forward(x, params)
    assert jnp.allclose(out, ref, atol=5e-2), float(jnp.max(jnp.abs(out - ref)))

    print("KERNEL_OK")
</pallas_src>

<mosaic_0001>
module attributes {stable_mosaic.version = 11 : i64} {
  func.func @mlp_kernel(%arg0: i32, %arg1: memref<16x784xbf16, #tpu.memory_space<vmem>>, %arg2: memref<784x128xbf16, #tpu.memory_space<vmem>>, %arg3: memref<1x128xf32, #tpu.memory_space<vmem>>, %arg4: memref<128x128xbf16, #tpu.memory_space<vmem>>, %arg5: memref<1x128xf32, #tpu.memory_space<vmem>>, %arg6: memref<128x128xbf16, #tpu.memory_space<vmem>>, %arg7: memref<1x128xf32, #tpu.memory_space<vmem>>, %arg8: memref<16x128xf32, #tpu.memory_space<vmem>>) attributes {dimension_semantics = [#tpu.dimension_semantics<parallel>], iteration_bounds = array<i64: 1>, scalar_prefetch = 0 : i64, scratch_operands = 0 : i64, tpu.core_type = #tpu.core_type<tc>, window_params = [{transform_indices = @transform_0, window_bounds = array<i64: 16, 784>}, {pipeline_mode = #tpu.pipeline_mode<synchronous>, transform_indices = @transform_1, window_bounds = array<i64: 784, 128>}, {pipeline_mode = #tpu.pipeline_mode<synchronous>, transform_indices = @transform_2, window_bounds = array<i64: 1, 128>}, {pipeline_mode = #tpu.pipeline_mode<synchronous>, transform_indices = @transform_3, window_bounds = array<i64: 128, 128>}, {pipeline_mode = #tpu.pipeline_mode<synchronous>, transform_indices = @transform_4, window_bounds = array<i64: 1, 128>}, {pipeline_mode = #tpu.pipeline_mode<synchronous>, transform_indices = @transform_5, window_bounds = array<i64: 128, 128>}, {pipeline_mode = #tpu.pipeline_mode<synchronous>, transform_indices = @transform_6, window_bounds = array<i64: 1, 128>}, {transform_indices = @transform_7, window_bounds = array<i64: 16, 128>}]} {
    %c0 = arith.constant 0 : index
    %c0_0 = arith.constant 0 : index
    %0 = vector.load %arg1[%c0, %c0_0] : memref<16x784xbf16, #tpu.memory_space<vmem>>, vector<16x784xbf16>
    %c0_1 = arith.constant 0 : index
    %c0_2 = arith.constant 0 : index
    %1 = vector.load %arg2[%c0_1, %c0_2] : memref<784x128xbf16, #tpu.memory_space<vmem>>, vector<784x128xbf16>
    %cst = arith.constant dense<0.000000e+00> : vector<16x128xf32>
    %2 = tpu.matmul %0, %1, %cst {dimension_numbers = #tpu.dot_dimension_numbers<[1], [0], [0], [1], [0, 0, 1, 1], [], []>} : vector<16x784xbf16>, vector<784x128xbf16>, vector<16x128xf32> -> vector<16x128xf32>
    %c0_3 = arith.constant 0 : index
    %c0_4 = arith.constant 0 : index
    %3 = vector.load %arg3[%c0_3, %c0_4] : memref<1x128xf32, #tpu.memory_space<vmem>>, vector<1x128xf32>
    %4 = vector.broadcast %3 : vector<1x128xf32> to vector<16x128xf32>
    %5 = arith.addf %2, %4 : vector<16x128xf32>
    %cst_5 = arith.constant 0.000000e+00 : f32
    %6 = vector.broadcast %cst_5 : f32 to vector<16x128xf32>
    %7 = arith.maximumf %5, %6 : vector<16x128xf32>
    %8 = arith.truncf %7 : vector<16x128xf32> to vector<16x128xbf16>
    %c0_6 = arith.constant 0 : index
    %c0_7 = arith.constant 0 : index
    %9 = vector.load %arg4[%c0_6, %c0_7] : memref<128x128xbf16, #tpu.memory_space<vmem>>, vector<128x128xbf16>
    %cst_8 = arith.constant dense<0.000000e+00> : vector<16x128xf32>
    %10 = tpu.matmul %8, %9, %cst_8 {dimension_numbers = #tpu.dot_dimension_numbers<[1], [0], [0], [1], [0, 0, 1, 1], [], []>} : vector<16x128xbf16>, vector<128x128xbf16>, vector<16x128xf32> -> vector<16x128xf32>
    %c0_9 = arith.constant 0 : index
    %c0_10 = arith.constant 0 : index
    %11 = vector.load %arg5[%c0_9, %c0_10] : memref<1x128xf32, #tpu.memory_space<vmem>>, vector<1x128xf32>
    %12 = vector.broadcast %11 : vector<1x128xf32> to vector<16x128xf32>
    %13 = arith.addf %10, %12 : vector<16x128xf32>
    %cst_11 = arith.constant 0.000000e+00 : f32
    %14 = vector.broadcast %cst_11 : f32 to vector<16x128xf32>
    %15 = arith.maximumf %13, %14 : vector<16x128xf32>
    %16 = arith.truncf %15 : vector<16x128xf32> to vector<16x128xbf16>
    %c0_12 = arith.constant 0 : index
    %c0_13 = arith.constant 0 : index
    %17 = vector.load %arg6[%c0_12, %c0_13] : memref<128x128xbf16, #tpu.memory_space<vmem>>, vector<128x128xbf16>
    %cst_14 = arith.constant dense<0.000000e+00> : vector<16x128xf32>
    %18 = tpu.matmul %16, %17, %cst_14 {dimension_numbers = #tpu.dot_dimension_numbers<[1], [0], [0], [1], [0, 0, 1, 1], [], []>} : vector<16x128xbf16>, vector<128x128xbf16>, vector<16x128xf32> -> vector<16x128xf32>
    %c0_15 = arith.constant 0 : index
    %c0_16 = arith.constant 0 : index
    %19 = vector.load %arg7[%c0_15, %c0_16] : memref<1x128xf32, #tpu.memory_space<vmem>>, vector<1x128xf32>
    %20 = vector.broadcast %19 : vector<1x128xf32> to vector<16x128xf32>
    %21 = arith.addf %18, %20 : vector<16x128xf32>
    %22 = tpu.iota {dimensions = array<i32: 1>} : vector<16x128xi32>
    %c10_i32 = arith.constant 10 : i32
    %23 = vector.broadcast %c10_i32 : i32 to vector<16x128xi32>
    %24 = arith.cmpi slt, %22, %23 : vector<16x128xi32>
    %cst_17 = arith.constant 0xFF800000 : f32
    %25 = vector.broadcast %cst_17 : f32 to vector<16x128xf32>
    %26 = arith.select %24, %21, %25 : vector<16x128xi1>, vector<16x128xf32>
    %cst_18 = arith.constant dense<0xFF800000> : vector<16xf32>
    %27 = vector.multi_reduction <maximumf>, %26, %cst_18 [1] : vector<16x128xf32> to vector<16xf32>
    %28 = vector.shape_cast %27 : vector<16xf32> to vector<16x1xf32>
    %29 = vector.broadcast %28 : vector<16x1xf32> to vector<16x128xf32>
    %30 = arith.subf %26, %29 : vector<16x128xf32>
    %31 = math.exp %30 : vector<16x128xf32>
    %cst_19 = arith.constant dense<0.000000e+00> : vector<16xf32>
    %32 = vector.multi_reduction <add>, %31, %cst_19 [1] : vector<16x128xf32> to vector<16xf32>
    %33 = vector.shape_cast %32 : vector<16xf32> to vector<16x1xf32>
    %34 = math.log %33 : vector<16x1xf32>
    %35 = vector.broadcast %34 : vector<16x1xf32> to vector<16x128xf32>
    %36 = arith.subf %30, %35 : vector<16x128xf32>
    %c0_20 = arith.constant 0 : index
    %c0_21 = arith.constant 0 : index
    %37 = vector.load %arg8[%c0_20, %c0_21] : memref<16x128xf32, #tpu.memory_space<vmem>>, vector<16x128xf32>
    tpu.vector_store %arg8[%c0_20, %c0_21], %36 {strides = array<i32>} : memref<16x128xf32, #tpu.memory_space<vmem>>, vector<16x128xf32>,
    return
  }
  func.func @transform_0(%arg0: i32) -> (i32, i32) {
    %c0_i32 = arith.constant 0 : i32
    %c0_i32_0 = arith.constant 0 : i32
    return %arg0, %c0_i32 : i32, i32
  }
  func.func @transform_1(%arg0: i32) -> (i32, i32) {
    %c0_i32 = arith.constant 0 : i32
    %c0_i32_0 = arith.constant 0 : i32
    %c0_i32_1 = arith.constant 0 : i32
    return %c0_i32, %c0_i32_0 : i32, i32
  }
  func.func @transform_2(%arg0: i32) -> (i32, i32) {
    %c0_i32 = arith.constant 0 : i32
    %c0_i32_0 = arith.constant 0 : i32
    %c0_i32_1 = arith.constant 0 : i32
    return %c0_i32, %c0_i32_0 : i32, i32
  }
  func.func @transform_3(%arg0: i32) -> (i32, i32) {
    %c0_i32 = arith.constant 0 : i32
    %c0_i32_0 = arith.constant 0 : i32
    %c0_i32_1 = arith.constant 0 : i32
    return %c0_i32, %c0_i32_0 : i32, i32
  }
  func.func @transform_4(%arg0: i32) -> (i32, i32) {
    %c0_i32 = arith.constant 0 : i32
    %c0_i32_0 = arith.constant 0 : i32
    %c0_i32_1 = arith.constant 0 : i32
    return %c0_i32, %c0_i32_0 : i32, i32
  }
  func.func @transform_5(%arg0: i32) -> (i32, i32) {
    %c0_i32 = arith.constant 0 : i32
    %c0_i32_0 = arith.constant 0 : i32
    %c0_i32_1 = arith.constant 0 : i32
    return %c0_i32, %c0_i32_0 : i32, i32
  }
  func.func @transform_6(%arg0: i32) -> (i32, i32) {
    %c0_i32 = arith.constant 0 : i32
    %c0_i32_0 = arith.constant 0 : i32
    %c0_i32_1 = arith.constant 0 : i32
    return %c0_i32, %c0_i32_0 : i32, i32
  }
  func.func @transform_7(%arg0: i32) -> (i32, i32) {
    %c0_i32 = arith.constant 0 : i32
    %c0_i32_0 = arith.constant 0 : i32
    return %arg0, %c0_i32 : i32, i32
  }
}

</mosaic_0001>

<llo_original>
// kernel: net_forward.1
$region0: #{net_forward.1}
  #allocation0 [shape = 'u32[]', space=smem, size = 0x4, offset = 0x4, fixed_abs, tag = 'smem constant byte address 0x4 - core index']
  #allocation1 [shape = 'u32[144,128]{1,0:T(1,128)}', space=vmem, size = 0x12000, scoped, tag = 'internal scratch']
  %s0 = inlined_call_operand.vmem [shape: bf16[16,784], index: 0, kind: input, shape index: {}]
  %s1 = inlined_call_operand.vmem [shape: bf16[784,128], index: 1, kind: input, shape index: {}]
  %s2 = inlined_call_operand.vmem [shape: f32[1,128], index: 2, kind: input, shape index: {}]
  %s3 = inlined_call_operand.vmem [shape: bf16[128,128], index: 3, kind: input, shape index: {}]
  %s4 = inlined_call_operand.vmem [shape: f32[1,128], index: 4, kind: input, shape index: {}]
  %s5 = inlined_call_operand.vmem [shape: bf16[128,128], index: 5, kind: input, shape index: {}]
  %s6 = inlined_call_operand.vmem [shape: f32[1,128], index: 6, kind: input, shape index: {}]
  %s7 = inlined_call_operand.vmem [shape: f32[16,128], index: 7, kind: output, shape index: {}]
  %s8 = sld [smem:[#allocation0]]
  $region38: #{net_forward.1} parent=0
    _
  %s10 = ssub.s32 1, %s8
  %s11 = scalar_select 0, %s10, %s8
  // Predicated region
  $region2: #{net_forward.1} parent=0 // pred_check
    _
  $region3: #{net_forward.1} parent=0 // pred_check_branch
    %13 = sbr.rel (0) target = $region5
  $region4: #{net_forward.1} parent=0 // pred_region
    _
  $region5: #{net_forward.1} parent=0 // pred_fallthru
    _
  // Predicated region
  $region6: #{net_forward.1} parent=0 // pred_check
    _
  $region7: #{net_forward.1} parent=0 // pred_check_branch
    %15 = sbr.rel (0) target = $region9
  $region8: #{net_forward.1} parent=0 // pred_region
    _
  $region9: #{net_forward.1} parent=0 // pred_fallthru
    _
  // Predicated region
  $region10: #{net_forward.1} parent=0 // pred_check
    _
  $region11: #{net_forward.1} parent=0 // pred_check_branch
    %17 = sbr.rel (0) target = $region13
  $region12: #{net_forward.1} parent=0 // pred_region
    _
  $region13: #{net_forward.1} parent=0 // pred_fallthru
    _
  // Predicated region
  $region14: #{net_forward.1} parent=0 // pred_check
    _
  $region15: #{net_forward.1} parent=0 // pred_check_branch
    %19 = sbr.rel (0) target = $region17
  $region16: #{net_forward.1} parent=0 // pred_region
    _
  $region17: #{net_forward.1} parent=0 // pred_fallthru
    _
  // Predicated region
  $region18: #{net_forward.1} parent=0 // pred_check
    _
  $region19: #{net_forward.1} parent=0 // pred_check_branch
    %21 = sbr.rel (0) target = $region21
  $region20: #{net_forward.1} parent=0 // pred_region
    _
  $region21: #{net_forward.1} parent=0 // pred_fallthru
    _
  // Predicated region
  $region22: #{net_forward.1} parent=0 // pred_check
    _
  $region23: #{net_forward.1} parent=0 // pred_check_branch
    %23 = sbr.rel (0) target = $region25
  $region24: #{net_forward.1} parent=0 // pred_region
    _
  $region25: #{net_forward.1} parent=0 // pred_fallthru
    _
  // Predicated region
  $region26: #{net_forward.1} parent=0 // pred_check
    _
  $region27: #{net_forward.1} parent=0 // pred_check_branch
    %25 = sbr.rel (0) target = $region29
  $region28: #{net_forward.1} parent=0 // pred_region
    _
  $region29: #{net_forward.1} parent=0 // pred_fallthru
    _
  %v27 = vld [vmem:[%s0] sm:$0xff]
  %v28 = vld [vmem:[%s0 + $0x8] sm:$0xff]
  %v29 = vld [vmem:[%s0 + $0x10] sm:$0xff]
  %v30 = vld [vmem:[%s0 + $0x18] sm:$0xf]
  %v31 = vld [vmem:[%s0 + $0x1c] sm:$0xff]
  %v32 = vld [vmem:[%s0 + $0x24] sm:$0xff]
  %v33 = vld [vmem:[%s0 + $0x2c] sm:$0xff]
  %v34 = vld [vmem:[%s0 + $0x34] sm:$0xf]
  %v35 = vld [vmem:[%s1] sm:$0xf]
  %v36 = vld [vmem:[%s1 + $0x4] sm:$0xf]
  %v37 = vld [vmem:[%s1 + $0x8] sm:$0xf]
  %v38 = vld [vmem:[%s1 + $0xc] sm:$0xf]
  %v39 = vld [vmem:[%s1 + $0x10] sm:$0xf]
  %v40 = vld [vmem:[%s1 + $0x14] sm:$0xf]
  %v41 = vld [vmem:[%s1 + $0x18] sm:$0xf]
  %v42 = vld [vmem:[%s1 + $0x1c] sm:$0xf]
  %v43 = vld [vmem:[%s1 + $0x20] sm:$0xf]
  %v44 = vld [vmem:[%s1 + $0x24] sm:$0xf]
  %v45 = vld [vmem:[%s1 + $0x28] sm:$0xf]
  %v46 = vld [vmem:[%s1 + $0x2c] sm:$0xf]
  %v47 = vld [vmem:[%s1 + $0x30] sm:$0xf]
  %v48 = vld [vmem:[%s1 + $0x34] sm:$0xf]
  %v49 = vld [vmem:[%s1 + $0x38] sm:$0xf]
  %v50 = vld [vmem:[%s1 + $0x3c] sm:$0xf]
  %v51 = vld [vmem:[%s1 + $0x40] sm:$0xf]
  %v52 = vld [vmem:[%s1 + $0x44] sm:$0xf]
  %v53 = vld [vmem:[%s1 + $0x48] sm:$0xf]
  %v54 = vld [vmem:[%s1 + $0x4c] sm:$0xf]
  %v55 = vld [vmem:[%s1 + $0x50] sm:$0xf]
  %v56 = vld [vmem:[%s1 + $0x54] sm:$0xf]
  %v57 = vld [vmem:[%s1 + $0x58] sm:$0xf]
  %v58 = vld [vmem:[%s1 + $0x5c] sm:$0xf]
  %v59 = vld [vmem:[%s1 + $0x60] sm:$0xf]
  %v60 = vld [vmem:[%s1 + $0x64] sm:$0xf]
  %v61 = vld [vmem:[%s1 + $0x68] sm:$0xf]
  %v62 = vld [vmem:[%s1 + $0x6c] sm:$0xf]
  %v63 = vld [vmem:[%s1 + $0x70] sm:$0xf]
  %v64 = vld [vmem:[%s1 + $0x74] sm:$0xf]
  %v65 = vld [vmem:[%s1 + $0x78] sm:$0xf]
  %v66 = vld [vmem:[%s1 + $0x7c] sm:$0xf]
  %v67 = vld [vmem:[%s1 + $0x80] sm:$0xf]
  %v68 = vld [vmem:[%s1 + $0x84] sm:$0xf]
  %v69 = vld [vmem:[%s1 + $0x88] sm:$0xf]
  %v70 = vld [vmem:[%s1 + $0x8c] sm:$0xf]
  %v71 = vld [vmem:[%s1 + $0x90] sm:$0xf]
  %v72 = vld [vmem:[%s1 + $0x94] sm:$0xf]
  %v73 = vld [vmem:[%s1 + $0x98] sm:$0xf]
  %v74 = vld [vmem:[%s1 + $0x9c] sm:$0xf]
  %v75 = vld [vmem:[%s1 + $0xa0] sm:$0xf]
  %v76 = vld [vmem:[%s1 + $0xa4] sm:$0xf]
  %v77 = vld [vmem:[%s1 + $0xa8] sm:$0xf]
  %v78 = vld [vmem:[%s1 + $0xac] sm:$0xf]
  %v79 = vld [vmem:[%s1 + $0xb0] sm:$0xf]
  %v80 = vld [vmem:[%s1 + $0xb4] sm:$0xf]
  %v81 = vld [vmem:[%s1 + $0xb8] sm:$0xf]
  %v82 = vld [vmem:[%s1 + $0xbc] sm:$0xf]
  %v83 = vld [vmem:[%s1 + $0xc0] sm:$0xf]
  %v84 = vld [vmem:[%s1 + $0xc4] sm:$0xf]
  %v85 = vld [vmem:[%s1 + $0xc8] sm:$0xf]
  %v86 = vld [vmem:[%s1 + $0xcc] sm:$0xf]
  %v87 = vld [vmem:[%s1 + $0xd0] sm:$0xf]
  %v88 = vld [vmem:[%s1 + $0xd4] sm:$0xf]
  %v89 = vld [vmem:[%s1 + $0xd8] sm:$0xf]
  %v90 = vld [vmem:[%s1 + $0xdc] sm:$0xf]
  %v91 = vld [vmem:[%s1 + $0xe0] sm:$0xf]
  %v92 = vld [vmem:[%s1 + $0xe4] sm:$0xf]
  %v93 = vld [vmem:[%s1 + $0xe8] sm:$0xf]
  %v94 = vld [vmem:[%s1 + $0xec] sm:$0xf]
  %v95 = vld [vmem:[%s1 + $0xf0] sm:$0xf]
  %v96 = vld [vmem:[%s1 + $0xf4] sm:$0xf]
  %v97 = vld [vmem:[%s1 + $0xf8] sm:$0xf]
  %v98 = vld [vmem:[%s1 + $0xfc] sm:$0xf]
  %v99 = vld [vmem:[%s1 + $0x100] sm:$0xf]
  %v100 = vld [vmem:[%s1 + $0x104] sm:$0xf]
  %v101 = vld [vmem:[%s1 + $0x108] sm:$0xf]
  %v102 = vld [vmem:[%s1 + $0x10c] sm:$0xf]
  %v103 = vld [vmem:[%s1 + $0x110] sm:$0xf]
  %v104 = vld [vmem:[%s1 + $0x114] sm:$0xf]
  %v105 = vld [vmem:[%s1 + $0x118] sm:$0xf]
  %v106 = vld [vmem:[%s1 + $0x11c] sm:$0xf]
  %v107 = vld [vmem:[%s1 + $0x120] sm:$0xf]
  %v108 = vld [vmem:[%s1 + $0x124] sm:$0xf]
  %v109 = vld [vmem:[%s1 + $0x128] sm:$0xf]
  %v110 = vld [vmem:[%s1 + $0x12c] sm:$0xf]
  %v111 = vld [vmem:[%s1 + $0x130] sm:$0xf]
  %v112 = vld [vmem:[%s1 + $0x134] sm:$0xf]
  %v113 = vld [vmem:[%s1 + $0x138] sm:$0xf]
  %v114 = vld [vmem:[%s1 + $0x13c] sm:$0xf]
  %v115 = vld [vmem:[%s1 + $0x140] sm:$0xf]
  %v116 = vld [vmem:[%s1 + $0x144] sm:$0xf]
  %v117 = vld [vmem:[%s1 + $0x148] sm:$0xf]
  %v118 = vld [vmem:[%s1 + $0x14c] sm:$0xf]
  %v119 = vld [vmem:[%s1 + $0x150] sm:$0xf]
  %v120 = vld [vmem:[%s1 + $0x154] sm:$0xf]
  %v121 = vld [vmem:[%s1 + $0x158] sm:$0xf]
  %v122 = vld [vmem:[%s1 + $0x15c] sm:$0xf]
  %v123 = vld [vmem:[%s1 + $0x160] sm:$0xf]
  %v124 = vld [vmem:[%s1 + $0x164] sm:$0xf]
  %v125 = vld [vmem:[%s1 + $0x168] sm:$0xf]
  %v126 = vld [vmem:[%s1 + $0x16c] sm:$0xf]
  %v127 = vld [vmem:[%s1 + $0x170] sm:$0xf]
  %v128 = vld [vmem:[%s1 + $0x174] sm:$0xf]
  %v129 = vld [vmem:[%s1 + $0x178] sm:$0xf]
  %v130 = vld [vmem:[%s1 + $0x17c] sm:$0xf]
  %v131 = vld [vmem:[%s1 + $0x180] sm:$0xf]
  %v132 = vld [vmem:[%s1 + $0x184] sm:$0xf]
  %v133 = vld [vmem:[%s2] sm:$0x1]
  %v135 = vlaneseq
  %v136 = vshrl.u32 %v135, 7
  %v137 = vsub.s32 0, %v136
  %v138 = vrot.slane %v133, %v137
  %v148 = vunpack.c.l.b16 %v27
  %v149 = vunpack.c.h.b16 %v27
  %v150 = vunpack.c.l.b16 %v28
  %v151 = vunpack.c.h.b16 %v28
  %v152 = vunpack.c.l.b16 %v29
  %v153 = vunpack.c.h.b16 %v29
  %v154 = vunpack.c.l.b16 %v30
  %v155 = vunpack.c.l.b16 %v31
  %v156 = vunpack.c.h.b16 %v31
  %v157 = vunpack.c.l.b16 %v32
  %v158 = vunpack.c.h.b16 %v32
  %v159 = vunpack.c.l.b16 %v33
  %v160 = vunpack.c.h.b16 %v33
  %v161 = vunpack.c.l.b16 %v34
  %v162 = vpack.c.b16 %v155, %v148
  %v163 = vpack.c.b16 %v156, %v149
  %v164 = vpack.c.b16 %v157, %v150
  %v165 = vpack.c.b16 %v158, %v151
  %v166 = vpack.c.b16 %v159, %v152
  %v167 = vpack.c.b16 %v160, %v153
  %v168 = vpack.c.b16 %v161, %v154
  %v273 = vunpack.c.l.b16 %v35
  %v274 = vunpack.c.l.b16 %v36
  %v275 = vunpack.c.l.b16 %v37
  %v276 = vunpack.c.l.b16 %v38
  %v277 = vunpack.c.l.b16 %v39
  %v278 = vunpack.c.l.b16 %v40
  %v279 = vunpack.c.l.b16 %v41
  %v280 = vunpack.c.l.b16 %v42
  %v281 = vunpack.c.l.b16 %v43
  %v282 = vunpack.c.l.b16 %v44
  %v283 = vunpack.c.l.b16 %v45
  %v284 = vunpack.c.l.b16 %v46
  %v285 = vunpack.c.l.b16 %v47
  %v286 = vunpack.c.l.b16 %v48
  %v287 = vunpack.c.l.b16 %v49
  %v288 = vunpack.c.l.b16 %v50
  %v289 = vunpack.c.l.b16 %v51
  %v290 = vunpack.c.l.b16 %v52
  %v291 = vunpack.c.l.b16 %v53
  %v292 = vunpack.c.l.b16 %v54
  %v293 = vunpack.c.l.b16 %v55
  %v294 = vunpack.c.l.b16 %v56
  %v295 = vunpack.c.l.b16 %v57
  %v296 = vunpack.c.l.b16 %v58
  %v297 = vunpack.c.l.b16 %v59
  %v298 = vunpack.c.l.b16 %v60
  %v299 = vunpack.c.l.b16 %v61
  %v300 = vunpack.c.l.b16 %v62
  %v301 = vunpack.c.l.b16 %v63
  %v302 = vunpack.c.l.b16 %v64
  %v303 = vunpack.c.l.b16 %v65
  %v304 = vunpack.c.l.b16 %v66
  %v305 = vunpack.c.l.b16 %v67
  %v306 = vunpack.c.l.b16 %v68
  %v307 = vunpack.c.l.b16 %v69
  %v308 = vunpack.c.l.b16 %v70
  %v309 = vunpack.c.l.b16 %v71
  %v310 = vunpack.c.l.b16 %v72
  %v311 = vunpack.c.l.b16 %v73
  %v312 = vunpack.c.l.b16 %v74
  %v313 = vunpack.c.l.b16 %v75
  %v314 = vunpack.c.l.b16 %v76
  %v315 = vunpack.c.l.b16 %v77
  %v316 = vunpack.c.l.b16 %v78
  %v317 = vunpack.c.l.b16 %v79
  %v318 = vunpack.c.l.b16 %v80
  %v319 = vunpack.c.l.b16 %v81
  %v320 = vunpack.c.l.b16 %v82
  %v321 = vunpack.c.l.b16 %v83
  %v322 = vunpack.c.l.b16 %v84
  %v323 = vunpack.c.l.b16 %v85
  %v324 = vunpack.c.l.b16 %v86
  %v325 = vunpack.c.l.b16 %v87
  %v326 = vunpack.c.l.b16 %v88
  %v327 = vunpack.c.l.b16 %v89
  %v328 = vunpack.c.l.b16 %v90
  %v329 = vunpack.c.l.b16 %v91
  %v330 = vunpack.c.l.b16 %v92
  %v331 = vunpack.c.l.b16 %v93
  %v332 = vunpack.c.l.b16 %v94
  %v333 = vunpack.c.l.b16 %v95
  %v334 = vunpack.c.l.b16 %v96
  %v335 = vunpack.c.l.b16 %v97
  %v336 = vunpack.c.l.b16 %v98
  %v337 = vunpack.c.l.b16 %v99
  %v338 = vunpack.c.l.b16 %v100
  %v339 = vunpack.c.l.b16 %v101
  %v340 = vunpack.c.l.b16 %v102
  %v341 = vunpack.c.l.b16 %v103
  %v342 = vunpack.c.l.b16 %v104
  %v343 = vunpack.c.l.b16 %v105
  %v344 = vunpack.c.l.b16 %v106
  %v345 = vunpack.c.l.b16 %v107
  %v346 = vunpack.c.l.b16 %v108
  %v347 = vunpack.c.l.b16 %v109
  %v348 = vunpack.c.l.b16 %v110
  %v349 = vunpack.c.l.b16 %v111
  %v350 = vunpack.c.l.b16 %v112
  %v351 = vunpack.c.l.b16 %v113
  %v352 = vunpack.c.l.b16 %v114
  %v353 = vunpack.c.l.b16 %v115
  %v354 = vunpack.c.l.b16 %v116
  %v355 = vunpack.c.l.b16 %v117
  %v356 = vunpack.c.l.b16 %v118
  %v357 = vunpack.c.l.b16 %v119
  %v358 = vunpack.c.l.b16 %v120
  %v359 = vunpack.c.l.b16 %v121
  %v360 = vunpack.c.l.b16 %v122
  %v361 = vunpack.c.l.b16 %v123
  %v362 = vunpack.c.l.b16 %v124
  %v363 = vunpack.c.l.b16 %v125
  %v364 = vunpack.c.l.b16 %v126
  %v365 = vunpack.c.l.b16 %v127
  %v366 = vunpack.c.l.b16 %v128
  %v367 = vunpack.c.l.b16 %v129
  %v368 = vunpack.c.l.b16 %v130
  %v369 = vunpack.c.l.b16 %v131
  %v370 = vunpack.c.l.b16 %v132
  %v371 = vpack.c.b16 %v274, %v273
  %v372 = vpack.c.b16 %v276, %v275
  %v373 = vpack.c.b16 %v278, %v277
  %v374 = vpack.c.b16 %v280, %v279
  %v375 = vpack.c.b16 %v282, %v281
  %v376 = vpack.c.b16 %v284, %v283
  %v377 = vpack.c.b16 %v286, %v285
  %v378 = vpack.c.b16 %v288, %v287
  %v379 = vpack.c.b16 %v290, %v289
  %v380 = vpack.c.b16 %v292, %v291
  %v381 = vpack.c.b16 %v294, %v293
  %v382 = vpack.c.b16 %v296, %v295
  %v383 = vpack.c.b16 %v298, %v297
  %v384 = vpack.c.b16 %v300, %v299
  %v385 = vpack.c.b16 %v302, %v301
  %v386 = vpack.c.b16 %v304, %v303
  %v387 = vpack.c.b16 %v306, %v305
  %v388 = vpack.c.b16 %v308, %v307
  %v389 = vpack.c.b16 %v310, %v309
  %v390 = vpack.c.b16 %v312, %v311
  %v391 = vpack.c.b16 %v314, %v313
  %v392 = vpack.c.b16 %v316, %v315
  %v393 = vpack.c.b16 %v318, %v317
  %v394 = vpack.c.b16 %v320, %v319
  %v395 = vpack.c.b16 %v322, %v321
  %v396 = vpack.c.b16 %v324, %v323
  %v397 = vpack.c.b16 %v326, %v325
  %v398 = vpack.c.b16 %v328, %v327
  %v399 = vpack.c.b16 %v330, %v329
  %v400 = vpack.c.b16 %v332, %v331
  %v401 = vpack.c.b16 %v334, %v333
  %v402 = vpack.c.b16 %v336, %v335
  %v403 = vpack.c.b16 %v338, %v337
  %v404 = vpack.c.b16 %v340, %v339
  %v405 = vpack.c.b16 %v342, %v341
  %v406 = vpack.c.b16 %v344, %v343
  %v407 = vpack.c.b16 %v346, %v345
  %v408 = vpack.c.b16 %v348, %v347
  %v409 = vpack.c.b16 %v350, %v349
  %v410 = vpack.c.b16 %v352, %v351
  %v411 = vpack.c.b16 %v354, %v353
  %v412 = vpack.c.b16 %v356, %v355
  %v413 = vpack.c.b16 %v358, %v357
  %v414 = vpack.c.b16 %v360, %v359
  %v415 = vpack.c.b16 %v362, %v361
  %v416 = vpack.c.b16 %v364, %v363
  %v417 = vpack.c.b16 %v366, %v365
  %v418 = vpack.c.b16 %v368, %v367
  %v419 = vpack.c.b16 %v370, %v369
  %vm469 = vcmask 130048
  %v471 = vsel %vm469, %v168, 0
  %473 = vmatprep.subr.bf16.mxu0 0
  %474 = vmatpush1.bf16.msra.mxu0 %v371
  %475 = vmatprep.subr.bf16.mxu0 0
  %476 = vmatpush1.bf16.msra.mxu0 %v372
  %477 = vmatprep.subr.bf16.mxu0 0
  %478 = vmatpush1.bf16.msra.mxu0 %v373
  %479 = vmatprep.subr.bf16.mxu0 0
  %480 = vmatpush1.bf16.msra.mxu0 %v374
  %481 = vmatprep.subr.bf16.mxu0 0
  %482 = vmatpush1.bf16.msra.mxu0 %v375
  %483 = vmatprep.subr.bf16.mxu0 0
  %484 = vmatpush1.bf16.msra.mxu0 %v376
  %485 = vmatprep.subr.bf16.mxu0 0
  %486 = vmatpush1.bf16.msra.mxu0 %v377
  %487 = vmatprep.subr.bf16.mxu0 0
  %488 = vmatpush1.bf16.msra.mxu0 %v378
  %489 = vmatprep.subr.bf16.mxu0 0
  %490 = vmatpush1.bf16.msra.mxu0 %v379
  %491 = vmatprep.subr.bf16.mxu0 0
  %492 = vmatpush1.bf16.msra.mxu0 %v380
  %493 = vmatprep.subr.bf16.mxu0 0
  %494 = vmatpush1.bf16.msra.mxu0 %v381
  %495 = vmatprep.subr.bf16.mxu0 0
  %496 = vmatpush1.bf16.msra.mxu0 %v382
  %497 = vmatprep.subr.bf16.mxu0 0
  %498 = vmatpush1.bf16.msra.mxu0 %v383
  %499 = vmatprep.subr.bf16.mxu0 0
  %500 = vmatpush1.bf16.msra.mxu0 %v384
  %501 = vmatprep.subr.bf16.mxu0 0
  %502 = vmatpush1.bf16.msra.mxu0 %v385
  %503 = vmatprep.subr.bf16.mxu0 0
  %504 = vmatpush1.bf16.msra.mxu0 %v386
  %505 = vmatprep.mubr.bf16.mxu0 %v163
  %506 = vmatmul.mubr.bf16.gmra.mrb[0].mxu0 %v162
  %v507 = vpop.f32.mrb[0].mxu0
  %v508 = vadd.f32 %v138, %v507
  %v509 = vpop.f32.mrb[0].mxu0
  %v510 = vpop.f32.mrb[0].mxu0
  %v511 = vadd.f32 %v138, %v510
  %v512 = vpop.f32.mrb[0].mxu0
  %513 = vdwg.mxu0
  %514 = vmatprep.subr.bf16.mxu0 0
  %515 = vmatpush1.bf16.msra.mxu0 %v387
  %516 = vmatprep.subr.bf16.mxu0 0
  %517 = vmatpush1.bf16.msra.mxu0 %v388
  %518 = vmatprep.subr.bf16.mxu0 0
  %519 = vmatpush1.bf16.msra.mxu0 %v389
  %520 = vmatprep.subr.bf16.mxu0 0
  %521 = vmatpush1.bf16.msra.mxu0 %v390
  %522 = vmatprep.subr.bf16.mxu0 0
  %523 = vmatpush1.bf16.msra.mxu0 %v391
  %524 = vmatprep.subr.bf16.mxu0 0
  %525 = vmatpush1.bf16.msra.mxu0 %v392
  %526 = vmatprep.subr.bf16.mxu0 0
  %527 = vmatpush1.bf16.msra.mxu0 %v393
  %528 = vmatprep.subr.bf16.mxu0 0
  %529 = vmatpush1.bf16.msra.mxu0 %v394
  %530 = vmatprep.subr.bf16.mxu0 0
  %531 = vmatpush1.bf16.msra.mxu0 %v395
  %532 = vmatprep.subr.bf16.mxu0 0
  %533 = vmatpush1.bf16.msra.mxu0 %v396
  %534 = vmatprep.subr.bf16.mxu0 0
  %535 = vmatpush1.bf16.msra.mxu0 %v397
  %536 = vmatprep.subr.bf16.mxu0 0
  %537 = vmatpush1.bf16.msra.mxu0 %v398
  %538 = vmatprep.subr.bf16.mxu0 0
  %539 = vmatpush1.bf16.msra.mxu0 %v399
  %540 = vmatprep.subr.bf16.mxu0 0
  %541 = vmatpush1.bf16.msra.mxu0 %v400
  %542 = vmatprep.subr.bf16.mxu0 0
  %543 = vmatpush1.bf16.msra.mxu0 %v401
  %544 = vmatprep.subr.bf16.mxu0 0
  %545 = vmatpush1.bf16.msra.mxu0 %v402
  %546 = vmatprep.mubr.bf16.mxu0 %v165
  %547 = vmatmul.mubr.bf16.gmra.mrb[0].mxu0 %v164
  %v548 = vpop.f32.mrb[0].mxu0
  %v549 = vadd.f32 %v508, %v548
  %v550 = vpop.f32.mrb[0].mxu0
  %v551 = vpop.f32.mrb[0].mxu0
  %v552 = vadd.f32 %v511, %v551
  %v553 = vpop.f32.mrb[0].mxu0
  %554 = vdwg.mxu0
  %555 = vmatprep.subr.bf16.mxu0 0
  %556 = vmatpush1.bf16.msra.mxu0 %v403
  %557 = vmatprep.subr.bf16.mxu0 0
  %558 = vmatpush1.bf16.msra.mxu0 %v404
  %559 = vmatprep.subr.bf16.mxu0 0
  %560 = vmatpush1.bf16.msra.mxu0 %v405
  %561 = vmatprep.subr.bf16.mxu0 0
  %562 = vmatpush1.bf16.msra.mxu0 %v406
  %563 = vmatprep.subr.bf16.mxu0 0
  %564 = vmatpush1.bf16.msra.mxu0 %v407
  %565 = vmatprep.subr.bf16.mxu0 0
  %566 = vmatpush1.bf16.msra.mxu0 %v408
  %567 = vmatprep.subr.bf16.mxu0 0
  %568 = vmatpush1.bf16.msra.mxu0 %v409
  %569 = vmatprep.subr.bf16.mxu0 0
  %570 = vmatpush1.bf16.msra.mxu0 %v410
  %571 = vmatprep.subr.bf16.mxu0 0
  %572 = vmatpush1.bf16.msra.mxu0 %v411
  %573 = vmatprep.subr.bf16.mxu0 0
  %574 = vmatpush1.bf16.msra.mxu0 %v412
  %575 = vmatprep.subr.bf16.mxu0 0
  %576 = vmatpush1.bf16.msra.mxu0 %v413
  %577 = vmatprep.subr.bf16.mxu0 0
  %578 = vmatpush1.bf16.msra.mxu0 %v414
  %579 = vmatprep.subr.bf16.mxu0 0
  %580 = vmatpush1.bf16.msra.mxu0 %v415
  %581 = vmatprep.subr.bf16.mxu0 0
  %582 = vmatpush1.bf16.msra.mxu0 %v416
  %583 = vmatprep.subr.bf16.mxu0 0
  %584 = vmatpush1.bf16.msra.mxu0 %v417
  %585 = vmatprep.subr.bf16.mxu0 0
  %586 = vmatpush1.bf16.msra.mxu0 %v418
  %587 = vmatprep.mubr.bf16.mxu0 %v167
  %588 = vmatmul.mubr.bf16.gmra.mrb[0].mxu0 %v166
  %v589 = vpop.f32.mrb[0].mxu0
  %v590 = vadd.f32 %v549, %v589
  %v591 = vpop.f32.mrb[0].mxu0
  %v592 = vpop.f32.mrb[0].mxu0
  %v593 = vadd.f32 %v552, %v592
  %v594 = vpop.f32.mrb[0].mxu0
  %595 = vdwg.mxu0
  %596 = vmatprep.subr.bf16.mxu0 0
  %597 = vmatpush1.bf16.msra.mxu0 %v419
  %598 = vmatprep.subr.bf16.mxu0 0
  %599 = vmatpush1.bf16.msra.mxu0 0
  %600 = vmatprep.subr.bf16.mxu0 0
  %601 = vmatpush1.bf16.msra.mxu0 0
  %602 = vmatprep.subr.bf16.mxu0 0
  %603 = vmatpush1.bf16.msra.mxu0 0
  %604 = vmatprep.subr.bf16.mxu0 0
  %605 = vmatpush1.bf16.msra.mxu0 0
  %606 = vmatprep.subr.bf16.mxu0 0
  %607 = vmatpush1.bf16.msra.mxu0 0
  %608 = vmatprep.subr.bf16.mxu0 0
  %609 = vmatpush1.bf16.msra.mxu0 0
  %610 = vmatprep.subr.bf16.mxu0 0
  %611 = vmatpush1.bf16.msra.mxu0 0
  %612 = vmatprep.subr.bf16.mxu0 0
  %613 = vmatpush1.bf16.msra.mxu0 0
  %614 = vmatprep.subr.bf16.mxu0 0
  %615 = vmatpush1.bf16.msra.mxu0 0
  %616 = vmatprep.subr.bf16.mxu0 0
  %617 = vmatpush1.bf16.msra.mxu0 0
  %618 = vmatprep.subr.bf16.mxu0 0
  %619 = vmatpush1.bf16.msra.mxu0 0
  %620 = vmatprep.subr.bf16.mxu0 0
  %621 = vmatpush1.bf16.msra.mxu0 0
  %622 = vmatprep.subr.bf16.mxu0 0
  %623 = vmatpush1.bf16.msra.mxu0 0
  %624 = vmatprep.subr.bf16.mxu0 0
  %625 = vmatpush1.bf16.msra.mxu0 0
  %626 = vmatprep.subr.bf16.mxu0 0
  %627 = vmatpush1.bf16.msra.mxu0 0
  %628 = vmatprep.mubr.bf16.mxu0 0
  %629 = vmatmul.mubr.bf16.gmra.mrb[0].mxu0 %v471
  %v630 = vpop.f32.mrb[0].mxu0
  %v631 = vadd.f32 %v590, %v630
  %v632 = vpop.f32.mrb[0].mxu0
  %v633 = vpop.f32.mrb[0].mxu0
  %v634 = vadd.f32 %v593, %v633
  %v635 = vpop.f32.mrb[0].mxu0
  %636 = vdwg.mxu0
  %v637 = vmax.f32 %v631, 0.0
  %v638 = vmax.f32 %v634, 0.0
  %v639 = vpack.c.bf16 %v638, %v637
  %v640 = vld [vmem:[%s3] sm:$0xf]
  %v641 = vld [vmem:[%s3 + $0x4] sm:$0xf]
  %v642 = vld [vmem:[%s3 + $0x8] sm:$0xf]
  %v643 = vld [vmem:[%s3 + $0xc] sm:$0xf]
  %v644 = vld [vmem:[%s3 + $0x10] sm:$0xf]
  %v645 = vld [vmem:[%s3 + $0x14] sm:$0xf]
  %v646 = vld [vmem:[%s3 + $0x18] sm:$0xf]
  %v647 = vld [vmem:[%s3 + $0x1c] sm:$0xf]
  %v648 = vld [vmem:[%s3 + $0x20] sm:$0xf]
  %v649 = vld [vmem:[%s3 + $0x24] sm:$0xf]
  %v650 = vld [vmem:[%s3 + $0x28] sm:$0xf]
  %v651 = vld [vmem:[%s3 + $0x2c] sm:$0xf]
  %v652 = vld [vmem:[%s3 + $0x30] sm:$0xf]
  %v653 = vld [vmem:[%s3 + $0x34] sm:$0xf]
  %v654 = vld [vmem:[%s3 + $0x38] sm:$0xf]
  %v655 = vld [vmem:[%s3 + $0x3c] sm:$0xf]
  %v656 = vld [vmem:[%s4] sm:$0x1]
  %v658 = vlaneseq
  %v659 = vshrl.u32 %v658, 7
  %v660 = vsub.s32 0, %v659
  %v661 = vrot.slane %v656, %v660
  %v679 = vunpack.c.l.b16 %v640
  %v680 = vunpack.c.l.b16 %v641
  %v681 = vunpack.c.l.b16 %v642
  %v682 = vunpack.c.l.b16 %v643
  %v683 = vunpack.c.l.b16 %v644
  %v684 = vunpack.c.l.b16 %v645
  %v685 = vunpack.c.l.b16 %v646
  %v686 = vunpack.c.l.b16 %v647
  %v687 = vunpack.c.l.b16 %v648
  %v688 = vunpack.c.l.b16 %v649
  %v689 = vunpack.c.l.b16 %v650
  %v690 = vunpack.c.l.b16 %v651
  %v691 = vunpack.c.l.b16 %v652
  %v692 = vunpack.c.l.b16 %v653
  %v693 = vunpack.c.l.b16 %v654
  %v694 = vunpack.c.l.b16 %v655
  %v695 = vpack.c.b16 %v680, %v679
  %v696 = vpack.c.b16 %v682, %v681
  %v697 = vpack.c.b16 %v684, %v683
  %v698 = vpack.c.b16 %v686, %v685
  %v699 = vpack.c.b16 %v688, %v687
  %v700 = vpack.c.b16 %v690, %v689
  %v701 = vpack.c.b16 %v692, %v691
  %v702 = vpack.c.b16 %v694, %v693
  %711 = vmatprep.subr.bf16.mxu0 0
  %712 = vmatpush1.bf16.msra.mxu0 %v695
  %713 = vmatprep.subr.bf16.mxu0 0
  %714 = vmatpush1.bf16.msra.mxu0 %v696
  %715 = vmatprep.subr.bf16.mxu0 0
  %716 = vmatpush1.bf16.msra.mxu0 %v697
  %717 = vmatprep.subr.bf16.mxu0 0
  %718 = vmatpush1.bf16.msra.mxu0 %v698
  %719 = vmatprep.subr.bf16.mxu0 0
  %720 = vmatpush1.bf16.msra.mxu0 %v699
  %721 = vmatprep.subr.bf16.mxu0 0
  %722 = vmatpush1.bf16.msra.mxu0 %v700
  %723 = vmatprep.subr.bf16.mxu0 0
  %724 = vmatpush1.bf16.msra.mxu0 %v701
  %725 = vmatprep.subr.bf16.mxu0 0
  %726 = vmatpush1.bf16.msra.mxu0 %v702
  %727 = vmatprep.subr.bf16.mxu0 0
  %728 = vmatpush1.bf16.msra.mxu0 0
  %729 = vmatprep.subr.bf16.mxu0 0
  %730 = vmatpush1.bf16.msra.mxu0 0
  %731 = vmatprep.subr.bf16.mxu0 0
  %732 = vmatpush1.bf16.msra.mxu0 0
  %733 = vmatprep.subr.bf16.mxu0 0
  %734 = vmatpush1.bf16.msra.mxu0 0
  %735 = vmatprep.subr.bf16.mxu0 0
  %736 = vmatpush1.bf16.msra.mxu0 0
  %737 = vmatprep.subr.bf16.mxu0 0
  %738 = vmatpush1.bf16.msra.mxu0 0
  %739 = vmatprep.subr.bf16.mxu0 0
  %740 = vmatpush1.bf16.msra.mxu0 0
  %741 = vmatprep.subr.bf16.mxu0 0
  %742 = vmatpush1.bf16.msra.mxu0 0
  %743 = vmatprep.mubr.bf16.mxu0 0
  %744 = vmatmul.mubr.bf16.gmra.mrb[0].mxu0 %v639
  %v745 = vpop.f32.mrb[0].mxu0
  %v746 = vadd.f32 %v661, %v745
  %v747 = vpop.f32.mrb[0].mxu0
  %v748 = vpop.f32.mrb[0].mxu0
  %v749 = vadd.f32 %v661, %v748
  %v750 = vpop.f32.mrb[0].mxu0
  %751 = vdwg.mxu0
  %v752 = vmax.f32 %v746, 0.0
  %v753 = vmax.f32 %v749, 0.0
  %v754 = vpack.c.bf16 %v753, %v752
  %v755 = vld [vmem:[%s5] sm:$0xf]
  %v756 = vld [vmem:[%s5 + $0x4] sm:$0xf]
  %v757 = vld [vmem:[%s5 + $0x8] sm:$0xf]
  %v758 = vld [vmem:[%s5 + $0xc] sm:$0xf]
  %v759 = vld [vmem:[%s5 + $0x10] sm:$0xf]
  %v760 = vld [vmem:[%s5 + $0x14] sm:$0xf]
  %v761 = vld [vmem:[%s5 + $0x18] sm:$0xf]
  %v762 = vld [vmem:[%s5 + $0x1c] sm:$0xf]
  %v763 = vld [vmem:[%s5 + $0x20] sm:$0xf]
  %v764 = vld [vmem:[%s5 + $0x24] sm:$0xf]
  %v765 = vld [vmem:[%s5 + $0x28] sm:$0xf]
  %v766 = vld [vmem:[%s5 + $0x2c] sm:$0xf]
  %v767 = vld [vmem:[%s5 + $0x30] sm:$0xf]
  %v768 = vld [vmem:[%s5 + $0x34] sm:$0xf]
  %v769 = vld [vmem:[%s5 + $0x38] sm:$0xf]
  %v770 = vld [vmem:[%s5 + $0x3c] sm:$0xf]
  %v771 = vld [vmem:[%s6] sm:$0x1]
  %v773 = vlaneseq
  %v774 = vshrl.u32 %v773, 7
  %v775 = vsub.s32 0, %v774
  %v776 = vrot.slane %v771, %v775
  %v794 = vunpack.c.l.b16 %v755
  %v795 = vunpack.c.l.b16 %v756
  %v796 = vunpack.c.l.b16 %v757
  %v797 = vunpack.c.l.b16 %v758
  %v798 = vunpack.c.l.b16 %v759
  %v799 = vunpack.c.l.b16 %v760
  %v800 = vunpack.c.l.b16 %v761
  %v801 = vunpack.c.l.b16 %v762
  %v802 = vunpack.c.l.b16 %v763
  %v803 = vunpack.c.l.b16 %v764
  %v804 = vunpack.c.l.b16 %v765
  %v805 = vunpack.c.l.b16 %v766
  %v806 = vunpack.c.l.b16 %v767
  %v807 = vunpack.c.l.b16 %v768
  %v808 = vunpack.c.l.b16 %v769
  %v809 = vunpack.c.l.b16 %v770
  %v810 = vpack.c.b16 %v795, %v794
  %v811 = vpack.c.b16 %v797, %v796
  %v812 = vpack.c.b16 %v799, %v798
  %v813 = vpack.c.b16 %v801, %v800
  %v814 = vpack.c.b16 %v803, %v802
  %v815 = vpack.c.b16 %v805, %v804
  %v816 = vpack.c.b16 %v807, %v806
  %v817 = vpack.c.b16 %v809, %v808
  %826 = vmatprep.subr.bf16.mxu0 0
  %827 = vmatpush1.bf16.msra.mxu0 %v810
  %828 = vmatprep.subr.bf16.mxu0 0
  %829 = vmatpush1.bf16.msra.mxu0 %v811
  %830 = vmatprep.subr.bf16.mxu0 0
  %831 = vmatpush1.bf16.msra.mxu0 %v812
  %832 = vmatprep.subr.bf16.mxu0 0
  %833 = vmatpush1.bf16.msra.mxu0 %v813
  %834 = vmatprep.subr.bf16.mxu0 0
  %835 = vmatpush1.bf16.msra.mxu0 %v814
  %836 = vmatprep.subr.bf16.mxu0 0
  %837 = vmatpush1.bf16.msra.mxu0 %v815
  %838 = vmatprep.subr.bf16.mxu0 0
  %839 = vmatpush1.bf16.msra.mxu0 %v816
  %840 = vmatprep.subr.bf16.mxu0 0
  %841 = vmatpush1.bf16.msra.mxu0 %v817
  %842 = vmatprep.subr.bf16.mxu0 0
  %843 = vmatpush1.bf16.msra.mxu0 0
  %844 = vmatprep.subr.bf16.mxu0 0
  %845 = vmatpush1.bf16.msra.mxu0 0
  %846 = vmatprep.subr.bf16.mxu0 0
  %847 = vmatpush1.bf16.msra.mxu0 0
  %848 = vmatprep.subr.bf16.mxu0 0
  %849 = vmatpush1.bf16.msra.mxu0 0
  %850 = vmatprep.subr.bf16.mxu0 0
  %851 = vmatpush1.bf16.msra.mxu0 0
  %852 = vmatprep.subr.bf16.mxu0 0
  %853 = vmatpush1.bf16.msra.mxu0 0
  %854 = vmatprep.subr.bf16.mxu0 0
  %855 = vmatpush1.bf16.msra.mxu0 0
  %856 = vmatprep.subr.bf16.mxu0 0
  %857 = vmatpush1.bf16.msra.mxu0 0
  %858 = vmatprep.mubr.bf16.mxu0 0
  %859 = vmatmul.mubr.bf16.gmra.mrb[0].mxu0 %v754
  %v860 = vpop.f32.mrb[0].mxu0
  %v861 = vadd.f32 %v776, %v860
  %v862 = vpop.f32.mrb[0].mxu0
  %v863 = vpop.f32.mrb[0].mxu0
  %v864 = vadd.f32 %v776, %v863
  %v865 = vpop.f32.mrb[0].mxu0
  %866 = vdwg.mxu0
  %v867 = vlaneseq
  %v868 = vand.u32 %v867, 127
  %vm869 = vcmp.lt.s32.totalorder %v868, 10
  %v870 = vsel %vm869, %v861, -inf
  %v871 = vsel %vm869, %v864, -inf
  %872 = vmax.xlane.f32.xlu0 %v870
  %v873 = vpop.xlane.xlu0 %872
  %874 = vmax.xlane.f32.xlu0 %v871
  %v875 = vpop.xlane.xlu0 %874
  %v876 = vsub.f32 %v870, %v873
  %v877 = vsub.f32 %v871, %v875
  %v878 = vmul.f32 %v876, 1.442695
  %v879 = vpow.pop %v878
  %v880 = vmul.f32 %v877, 1.442695
  %v881 = vpow.pop %v880
  %882 = vadd.xlane.f32.xlu0 %v879
  %v883 = vpop.xlane.xlu0 %882
  %884 = vadd.xlane.f32.xlu0 %v881
  %v885 = vpop.xlane.xlu0 %884
  %v886 = vlog2.pop %v883
  %v887 = vmul.f32 %v886, 0.6931472
  %v888 = vlog2.pop %v885
  %v889 = vmul.f32 %v888, 0.6931472
  %v890 = vsub.f32 %v876, %v887
  %v891 = vsub.f32 %v877, %v889
  %892 = vst [vmem:[%s7] sm:$0xff] %v890
  %893 = vst [vmem:[%s7 + $0x8] sm:$0xff] %v891
  // Predicated region
  $region30: #{net_forward.1} parent=0 // pred_check
    _
  $region31: #{net_forward.1} parent=0 // pred_check_branch
    %895 = sbr.rel (0) target = $region33
  $region32: #{net_forward.1} parent=0 // pred_region
    _
  $region33: #{net_forward.1} parent=0 // pred_fallthru
    _
  // Predicated region
  $region34: #{net_forward.1} parent=0 // pred_check
    _
  $region35: #{net_forward.1} parent=0 // pred_check_branch
    %897 = sbr.rel (0) target = $region37
  $region36: #{net_forward.1} parent=0 // pred_region
    _
  $region37: #{net_forward.1} parent=0 // pred_fallthru
    _

</llo_original>
